<compile_context>
chip_gen: v5e
topology: v5e:2x2
jax: 0.10.0
libtpu: 0.0.40
codegen_flags: <defaults>
</compile_context>

<pallas_src>
import jax
import jax.numpy as jnp
from jax.experimental import pallas as pl
from jax.experimental.pallas import tpu as pltpu


# ---------------------------------------------------------------------------
# Kernels
# ---------------------------------------------------------------------------

def _transpose_tile_kernel(x_ref, o_ref):
    # x_ref: (1, tm, tn)  ->  o_ref: (1, tn, tm)   (XLU transpose of one tile)
    o_ref[0] = jnp.swapaxes(x_ref[0], 0, 1)


def _make_swap_full_kernel(ax0, ax1):
    def kernel(x_ref, o_ref):
        o_ref[0] = jnp.swapaxes(x_ref[0], ax0, ax1)
    return kernel


# ---------------------------------------------------------------------------
# Wrappers
# ---------------------------------------------------------------------------

def _pick_tile(dim, prefs=(512, 256, 128)):
    """Largest 128-multiple tile that divides `dim`, else the full extent."""
    for t in prefs:
        if dim % t == 0:
            return t
    return dim  # full extent is always a legal block size


def _transpose_last_two(x):
    """(P, M, N) -> (P, N, M) with a tiled, auto-pipelined Pallas kernel."""
    P, M, N = x.shape
    tm = _pick_tile(M)   # input sublane dim / OUTPUT lane dim -> keep >=128 when possible
    tn = _pick_tile(N)
    grid = (P, M // tm, N // tn)
    return pl.pallas_call(
        _transpose_tile_kernel,
        out_shape=jax.ShapeDtypeStruct((P, N, M), x.dtype),
        grid_spec=pltpu.PrefetchScalarGridSpec(
            num_scalar_prefetch=0,
            grid=grid,
            in_specs=[pl.BlockSpec((1, tm, tn), lambda p, i, j: (p, i, j))],
            out_specs=pl.BlockSpec((1, tn, tm), lambda p, i, j: (p, j, i)),
        ),
        compiler_params=pltpu.CompilerParams(
            dimension_semantics=("parallel", "parallel", "parallel")),
    )(x)


def pallas_transpose(x, dim0, dim1):
    """Pallas equivalent of torch.transpose(x, dim0, dim1)."""
    nd = x.ndim
    dim0 = dim0 % nd
    dim1 = dim1 % nd
    if dim0 == dim1:
        return x
    if dim0 > dim1:
        dim0, dim1 = dim1, dim0

    if dim0 == nd - 2 and dim1 == nd - 1:
        # Fast path: swap of the trailing two dims (the Transpose((1, 2)) case
        # for 3-D activations).  Collapse leading dims into one batch axis.
        lead = x.shape[:-2]
        P = 1
        for s in lead:
            P *= s
        M, N = x.shape[-2], x.shape[-1]
        y = _transpose_last_two(x.reshape((P, M, N)))
        return y.reshape(lead + (N, M))

    # General path: collapse everything before dim0 into a batch grid axis and
    # swap the two axes inside one full-extent VMEM block per batch element.
    # TODO(synk): tile this path for per-batch slabs that exceed VMEM.
    lead = x.shape[:dim0]
    P = 1
    for s in lead:
        P *= s
    rest = x.shape[dim0:]
    xr = x.reshape((P,) + rest)

    a = 0                # position of dim0 inside `rest`
    b = dim1 - dim0      # position of dim1 inside `rest`
    out_rest = list(rest)
    out_rest[a], out_rest[b] = out_rest[b], out_rest[a]
    out_rest = tuple(out_rest)
    zeros = (0,) * len(rest)

    y = pl.pallas_call(
        _make_swap_full_kernel(a, b),
        out_shape=jax.ShapeDtypeStruct((P,) + out_rest, x.dtype),
        grid_spec=pltpu.PrefetchScalarGridSpec(
            num_scalar_prefetch=0,
            grid=(P,),
            in_specs=[pl.BlockSpec((1,) + rest, lambda p: (p,) + zeros)],
            out_specs=pl.BlockSpec((1,) + out_rest, lambda p: (p,) + zeros),
        ),
        compiler_params=pltpu.CompilerParams(
            dimension_semantics=("parallel",)),
    )(xr)
    return y.reshape(lead + out_rest)


class Transpose:
    """Pallas counterpart of the PyTorch `Transpose` wrapper module."""

    def __init__(self, shape):
        self.shape = tuple(shape)

    def __call__(self, x):
        return pallas_transpose(x, *self.shape)


# ---------------------------------------------------------------------------
# Self-test
# ---------------------------------------------------------------------------

if __name__ == "__main__":
    key = jax.random.PRNGKey(0)
    k1, k2, k3 = jax.random.split(key, 3)

    # (B, C, T) -> (B, T, C): the Transpose((1, 2)) usage inside the model.
    x = jax.random.normal(k1, (2, 32, 16), jnp.float32)
    y = jax.block_until_ready(Transpose((1, 2))(x))
    assert y.shape == (2, 16, 32)
    assert bool(jnp.all(y == jnp.swapaxes(x, 1, 2)))

    # Larger shape: exercises the 128-aligned tiled path (grid = (2, 3, 1)).
    x2 = jax.random.normal(k2, (2, 384, 256), jnp.float32)
    y2 = jax.block_until_ready(Transpose((1, 2))(x2))
    assert y2.shape == (2, 256, 384)
    assert bool(jnp.all(y2 == jnp.swapaxes(x2, 1, 2)))

    # 4-D input with a non-trailing swap: exercises the general path.
    x3 = jax.random.normal(k3, (2, 4, 8, 16), jnp.float32)
    y3 = jax.block_until_ready(Transpose((1, 2))(x3))
    assert y3.shape == (2, 8, 4, 16)
    assert bool(jnp.all(y3 == jnp.swapaxes(x3, 1, 2)))

    print("KERNEL_OK")
</pallas_src>

<mosaic_0001>
module attributes {stable_mosaic.version = 11 : i64} {
  func.func @_transpose_tile_kernel(%arg0: i32, %arg1: i32, %arg2: i32, %arg3: memref<1x32x16xf32, #tpu.memory_space<vmem>>, %arg4: memref<1x16x32xf32, #tpu.memory_space<vmem>>) attributes {dimension_semantics = [#tpu.dimension_semantics<parallel>, #tpu.dimension_semantics<parallel>, #tpu.dimension_semantics<parallel>], iteration_bounds = array<i64: 2, 1, 1>, scalar_prefetch = 0 : i64, scratch_operands = 0 : i64, tpu.core_type = #tpu.core_type<tc>, window_params = [{transform_indices = @transform_0, window_bounds = array<i64: 1, 32, 16>}, {transform_indices = @transform_1, window_bounds = array<i64: 1, 16, 32>}]} {
    %c0 = arith.constant 0 : index
    %c0_0 = arith.constant 0 : index
    %c0_1 = arith.constant 0 : index
    %0 = vector.load %arg3[%c0, %c0_0, %c0_1] : memref<1x32x16xf32, #tpu.memory_space<vmem>>, vector<1x32x16xf32>
    %1 = vector.shape_cast %0 : vector<1x32x16xf32> to vector<32x16xf32>
    %2 = tpu.transpose %1, [1, 0] : vector<32x16xf32> -> vector<16x32xf32>
    %c0_2 = arith.constant 0 : index
    %c0_3 = arith.constant 0 : index
    %c0_4 = arith.constant 0 : index
    %3 = vector.load %arg4[%c0_2, %c0_3, %c0_4] : memref<1x16x32xf32, #tpu.memory_space<vmem>>, vector<1x16x32xf32>
    %4 = vector.shape_cast %3 : vector<1x16x32xf32> to vector<16x32xf32>
    %5 = vector.shape_cast %2 : vector<16x32xf32> to vector<1x16x32xf32>
    tpu.vector_store %arg4[%c0_2, %c0_3, %c0_4], %5 {strides = array<i32>} : memref<1x16x32xf32, #tpu.memory_space<vmem>>, vector<1x16x32xf32>,
    return
  }
  func.func @transform_0(%arg0: i32, %arg1: i32, %arg2: i32) -> (i32, i32, i32) {
    %c0_i32 = arith.constant 0 : i32
    return %arg0, %arg1, %arg2 : i32, i32, i32
  }
  func.func @transform_1(%arg0: i32, %arg1: i32, %arg2: i32) -> (i32, i32, i32) {
    %c0_i32 = arith.constant 0 : i32
    return %arg0, %arg2, %arg1 : i32, i32, i32
  }
}

</mosaic_0001>

<llo_original>
// kernel: tpu_custom_call.1
$region0: #{tpu_custom_call.1}
  #allocation0 [shape = 'u32[]', space=smem, size = 0x4, offset = 0x4, fixed_abs, tag = 'smem constant byte address 0x4 - core index']
  #allocation1 [shape = 'u32[72,128]{1,0:T(1,128)}', space=vmem, size = 0x9000, scoped, tag = 'internal scratch']
  %s0 = inlined_call_operand.vmem [shape: f32[2,32,16], index: 0, kind: input, shape index: {}]
  %s1 = inlined_call_operand.hbm [shape: f32[2,16,32], index: 1, kind: output, shape index: {}]
  %s2 = sld [smem:[#allocation0]]
  $region37: #{tpu_custom_call.1} parent=0
    _
  %s4 = ssub.s32 1, %s2
  %s5 = scalar_select 0, %s4, %s2
  $region1: #{tpu_custom_call.1} parent=0
    #allocation2 [shape = 'u8[16384]{0}', space=vmem, size = 0x4000, scoped, tag = 'output window, operand 0']
    #allocation3 [shape = 's32[2]{0}', space=sflag, size = 0x8, scoped, tag = 'scoped memory for tpu_custom_call.1']
    %6 = vsyncpa [#allocation3], 0
    %s7 = scalar_lea.sflag [#allocation3], 1
    %8 = vsyncpa %s7, 0
    loop: start=0, step=1, limit=4
    $region2: #{tpu_custom_call.1} parent=1 // loop_pre_header
      _
    $region3: #{tpu_custom_call.1} parent=1 // loop_header
      %s10 = sphi 0, %s14
      %p11 = scmp.ge.s32.totalorder %s10, 4
      %s17 = sphi 0, %s36
      %s18 = sphi 0, %s32
      %s19 = sphi 0, %s28
      %s20 = sphi 0, %s17
      %s21 = sphi 0, %s18
      %s22 = sphi 0, %s19
      %s23 = sphi 0, %s20
      %s24 = sphi 0, %s21
      %s25 = sphi 0, %s22
      %s43 = sphi 0, %s45
      %s46 = sphi 0, %s43
      %s47 = sphi 0, %s46
      %s63 = sphi 0, %s47
      %s73 = sphi 0, %s75
      %s76 = sphi 0, %s73
      %s77 = sphi 0, %s76
      %s93 = sphi 0, %s77
    $region4: #{tpu_custom_call.1} parent=1 // loop_header_branch
      %13 = sbr.rel (%p11) target = $region8
    $region5: #{tpu_custom_call.1} parent=1 // loop_body
      %s15 = ssub.s32 %s10, 1
      %s16 = ssub.s32 %s10, 2
      %s26 = sadd.s32 1, %s19
      %p27 = scmp.ge.s32.totalorder %s26, 1
      %s28 = scalar_select %p27, 0, %s26
      %s29 = sadd.s32 1, %s18
      %s30 = scalar_select %p27, %s29, %s18
      %p31 = scmp.ge.s32.totalorder %s30, 1
      %s32 = scalar_select %p31, 0, %s30
      %s33 = sadd.s32 1, %s17
      %s34 = scalar_select %p31, %s33, %s17
      %p35 = scmp.ge.s32.totalorder %s34, 2
      %s36 = scalar_select %p35, 0, %s34
      %s37 = ssub.s32 %s17, %s36
      %s38 = ssub.s32 %s18, %s32
      %s39 = sor.u32 %s37, %s38
      %s40 = ssub.s32 %s19, %s28
      %s41 = sor.u32 %s39, %s40
      %p42 = scmp.eq.s32.totalorder %s41, 0
      %s44 = sadd.s32 %s43, 1
      %s45 = scalar_select %p42, %s43, %s44
      %p48 = pneg %p42
      %p49 = scmp.eq.s32.totalorder %s10, 1
      %p50 = por %p48, %p49
      %p51 = scmp.ne.s32.totalorder %s43, %s46
      %p52 = scmp.eq.s32.totalorder %s10, 0
      %p53 = por %p51, %p52
      %p54 = scmp.ne.s32.totalorder %s43, %s46
      %p55 = scmp.eq.s32.totalorder %s15, 1
      %p56 = por %p54, %p55
      %p57 = scmp.ne.s32.totalorder %s46, %s47
      %p58 = scmp.eq.s32.totalorder %s15, 0
      %p59 = por %p57, %p58
      %p60 = scmp.ne.s32.totalorder %s46, %s47
      %p61 = scmp.eq.s32.totalorder %s16, 1
      %p62 = por %p60, %p61
      %p64 = scmp.ne.s32.totalorder %s47, %s63
      %p65 = scmp.eq.s32.totalorder %s16, 0
      %p66 = por %p64, %p65
      %s67 = ssub.s32 %s17, %s36
      %s68 = ssub.s32 %s19, %s28
      %s69 = sor.u32 %s67, %s68
      %s70 = ssub.s32 %s18, %s32
      %s71 = sor.u32 %s69, %s70
      %p72 = scmp.eq.s32.totalorder %s71, 0
      %s74 = sadd.s32 %s73, 1
      %s75 = scalar_select %p72, %s73, %s74
      %p78 = pneg %p72
      %p79 = scmp.eq.s32.totalorder %s10, 1
      %p80 = por %p78, %p79
      %p81 = scmp.ne.s32.totalorder %s73, %s76
      %p82 = scmp.eq.s32.totalorder %s10, 0
      %p83 = por %p81, %p82
      %p84 = scmp.ne.s32.totalorder %s73, %s76
      %p85 = scmp.eq.s32.totalorder %s15, 1
      %p86 = por %p84, %p85
      %p87 = scmp.ne.s32.totalorder %s76, %s77
      %p88 = scmp.eq.s32.totalorder %s15, 0
      %p89 = por %p87, %p88
      %p90 = scmp.ne.s32.totalorder %s76, %s77
      %p91 = scmp.eq.s32.totalorder %s16, 1
      %p92 = por %p90, %p91
      %p94 = scmp.ne.s32.totalorder %s77, %s93
      %p95 = scmp.eq.s32.totalorder %s16, 0
      %p96 = por %p94, %p95
      %p97 = scmp.le.s32.totalorder 1, %s10
      %p98 = scmp.lt.s32.totalorder %s10, 3
      %p99 = pnand %p97, %p98
      %p100 = pneg %p99
      // Predicated region
      $region9: #{tpu_custom_call.1} parent=5 // pred_check
        _
      $region10: #{tpu_custom_call.1} parent=5 // pred_check_branch
        %102 = sbr.rel (%p99) target = $region12
      $region11: #{tpu_custom_call.1} parent=5 // pred_region
        %s103 = ssub.s32 %s10, 1
      $region12: #{tpu_custom_call.1} parent=5 // pred_fallthru
        _
      %p104 = scmp.lt.s32.totalorder %s10, 2
      // Predicated region
      $region13: #{tpu_custom_call.1} parent=5 // pred_check
        %p105 = pneg %p104
      $region14: #{tpu_custom_call.1} parent=5 // pred_check_branch
        %107 = sbr.rel (%p105) target = $region16
      $region15: #{tpu_custom_call.1} parent=5 // pred_region
        // Predicated region
        $region17: #{tpu_custom_call.1} parent=15 // pred_check
          %p108 = pneg %p53
        $region18: #{tpu_custom_call.1} parent=15 // pred_check_branch
          %110 = sbr.rel (%p108) target = $region20
        $region19: #{tpu_custom_call.1} parent=15 // pred_region
          %s111 = smul.u32 4, %s18
          %p112 = scmp.lt.s32.totalorder %s17, 1
          %s113 = scalar_select %p112, %s17, 1
          %p114 = scmp.lt.s32.totalorder %s111, 3
          %s115 = scalar_select %p114, %s111, 3
          %p116 = scmp.lt.s32.totalorder %s19, 0
          %s117 = scalar_select %p116, %s19, 0
          %s118 = sadd.s32 %s117, %s115
          %s119 = smul.addr %s113, 4
          %s120 = sadd.s32 %s118, %s119
          %s121 = smul.addr %s120, 8
          %s122 = scalar_lea.vmem %s0, %s121
          %s123 = smul.u32 4, %s18
        $region20: #{tpu_custom_call.1} parent=15 // pred_fallthru
          _
      $region16: #{tpu_custom_call.1} parent=5 // pred_fallthru
        _
      %p124 = scmp.le.s32.totalorder 1, %s10
      %p125 = scmp.lt.s32.totalorder %s10, 3
      %p126 = pnand %p124, %p125
      %p127 = pneg %p126
      // Predicated region
      $region21: #{tpu_custom_call.1} parent=5 // pred_check
        _
      $region22: #{tpu_custom_call.1} parent=5 // pred_check_branch
        %129 = sbr.rel (%p126) target = $region24
      $region23: #{tpu_custom_call.1} parent=5 // pred_region
        %s130 = ssub.s32 %s10, 1
        %s131 = smul.u32 4, %s21
        %p132 = scmp.lt.s32.totalorder %s20, 1
        %s133 = scalar_select %p132, %s20, 1
        %p134 = scmp.lt.s32.totalorder %s131, 3
        %s135 = scalar_select %p134, %s131, 3
        %p136 = scmp.lt.s32.totalorder %s22, 0
        %s137 = scalar_select %p136, %s22, 0
        %s138 = sadd.s32 %s137, %s135
        %s139 = smul.addr %s133, 4
        %s140 = sadd.s32 %s138, %s139
        %s141 = smul.addr %s140, 8
        %s142 = scalar_lea.vmem %s0, %s141
        %p143 = pneg %p59
        %p144 = pneg %p56
        %p145 = pneg %p89
        %p146 = pneg %p86
        %s147 = sand.u32 %s76, 1
        %s148 = scalar_lea.sflag [#allocation3], %s147
        %s149 = sand.u32 %s76, 1
        %s150 = smul.addr %s149, 16
        %s151 = scalar_lea.vmem [#allocation2], %s150
        %s152 = smul.u32 4, %s21
        %p153 = scmp.lt.s32.totalorder %s20, 1
        %s154 = scalar_select %p153, %s20, 1
        %p155 = scmp.lt.s32.totalorder %s152, 3
        %s156 = scalar_select %p155, %s152, 3
        %p157 = scmp.lt.s32.totalorder %s22, 0
        %s158 = scalar_select %p157, %s22, 0
        %s159 = sadd.s32 %s158, %s156
        %s160 = smul.addr %s154, 4
        %s161 = sadd.s32 %s159, %s160
        %s162 = smul.addr %s161, 8
        %s163 = scalar_lea.vmem %s0, %s162
        %s164 = smul.u32 4, %s21
        %s165 = smul.u32 2, %s22
        %v166 = vld [vmem:[%s163] sm:$0xff]
        %v167 = vld [vmem:[%s163 + $0x8] sm:$0xff]
        %v168 = vld [vmem:[%s163 + $0x10] sm:$0xff]
        %v169 = vld [vmem:[%s163 + $0x18] sm:$0xff]
        %170 = vxpose.xlu0.b32.start [1/16] %v166, 128
        %171 = vxpose.xlu0.b32.cont [2/16] %v167, 128
        %172 = vxpose.xlu0.b32.cont [3/16] %v168, 128
        %173 = vxpose.xlu0.b32.cont [4/16] %v169, 128
        %174 = vxpose.xlu0.b32.cont [5/16] 0.0, 128
        %175 = vxpose.xlu0.b32.cont [6/16] 0.0, 128
        %176 = vxpose.xlu0.b32.cont [7/16] 0.0, 128
        %177 = vxpose.xlu0.b32.cont [8/16] 0.0, 128
        %178 = vxpose.xlu0.b32.cont [9/16] 0.0, 128
        %179 = vxpose.xlu0.b32.cont [10/16] 0.0, 128
        %180 = vxpose.xlu0.b32.cont [11/16] 0.0, 128
        %181 = vxpose.xlu0.b32.cont [12/16] 0.0, 128
        %182 = vxpose.xlu0.b32.cont [13/16] 0.0, 128
        %183 = vxpose.xlu0.b32.cont [14/16] 0.0, 128
        %184 = vxpose.xlu0.b32.cont [15/16] 0.0, 128
        %185 = vxpose.xlu0.b32.end [16/16] 0.0, 128
        %v186 = vpop.trf.xlu0
        %v187 = vpop.trf.xlu0
        %v188 = vpop.trf.xlu0
        %v189 = vpop.trf.xlu0
        %v190 = vpop.trf.xlu0
        %v191 = vpop.trf.xlu0
        %v192 = vpop.trf.xlu0
        %v193 = vpop.trf.xlu0
        %v194 = vpop.trf.xlu0
        %v195 = vpop.trf.xlu0
        %v196 = vpop.trf.xlu0
        %v197 = vpop.trf.xlu0
        %v198 = vpop.trf.xlu0
        %v199 = vpop.trf.xlu0
        %v200 = vpop.trf.xlu0
        %v201 = vpop.trf.xlu0
        %vm202 = vcmask 261120
        %203 = vst.msk [vmem:[%s151] sm:$0xff] %vm202, %v186
        %204 = vst.msk [vmem:[%s151 + $0x8] sm:$0xff] %vm202, %v187
        %s205 = sand.u32 %s76, 1
        %s206 = scalar_lea.sflag [#allocation3], %s205
        %s207 = sand.u32 %s76, 1
        %s208 = smul.addr %s207, 16
        %s209 = scalar_lea.vmem [#allocation2], %s208
        // Predicated region
        $region25: #{tpu_custom_call.1} parent=23 // pred_check
          %p210 = pneg %p86
        $region26: #{tpu_custom_call.1} parent=23 // pred_check_branch
          %212 = sbr.rel (%p210) target = $region28
        $region27: #{tpu_custom_call.1} parent=23 // pred_region
          %s213 = smul.u32 2, %s22
          %215 = vsyncadd %s206, 0
          %s216 = sadd.s32 %s21, %s213
          %s217 = smul.addr %s20, 2
          %s218 = sadd.s32 %s216, %s217
          %s219 = smul.addr %s218, 8
          %s220 = scalar_lea.hbm %s1, %s219
          %s221 = sshll.u32 %s209, 4
          %s222 = int_to_ptr.vmem [resolvable:$true] %s221
          %s223 = sshll.u32 %s220, 4
          %s224 = int_to_ptr.hbm [resolvable:$true] %s223
          %229 = dma.vmem_to_hbm [thread:$0]  %s222, 256, %s224, %s206, 128, 128, 8
        $region28: #{tpu_custom_call.1} parent=23 // pred_fallthru
          _
      $region24: #{tpu_custom_call.1} parent=5 // pred_fallthru
        _
      %p230 = scmp.le.s32.totalorder 2, %s10
      // Predicated region
      $region29: #{tpu_custom_call.1} parent=5 // pred_check
        %p231 = pneg %p230
      $region30: #{tpu_custom_call.1} parent=5 // pred_check_branch
        %233 = sbr.rel (%p231) target = $region32
      $region31: #{tpu_custom_call.1} parent=5 // pred_region
        %s234 = ssub.s32 %s10, 2
        // Predicated region
        $region33: #{tpu_custom_call.1} parent=31 // pred_check
          %p235 = pneg %p92
        $region34: #{tpu_custom_call.1} parent=31 // pred_check_branch
          %237 = sbr.rel (%p235) target = $region36
        $region35: #{tpu_custom_call.1} parent=31 // pred_region
          %s238 = sand.u32 %s77, 1
          %s239 = scalar_lea.sflag [#allocation3], %s238
          %s240 = sand.u32 %s77, 1
          %s241 = smul.addr %s240, 16
          %s242 = scalar_lea.vmem [#allocation2], %s241
          %244 = dma.done %s239, 256
        $region36: #{tpu_custom_call.1} parent=31 // pred_fallthru
          _
      $region32: #{tpu_custom_call.1} parent=5 // pred_fallthru
        _
    $region6: #{tpu_custom_call.1} parent=1 // loop_footer
      %s14 = sadd.s32 1, %s10
    $region7: #{tpu_custom_call.1} parent=1 // loop_footer_branch
      %9 = sbr.rel target = $region3
    $region8: #{tpu_custom_call.1} parent=1 // loop_exit
      _
    %245 = vsyncpa [#allocation3], 1
    %s246 = scalar_lea.sflag [#allocation3], 1
    %247 = vsyncpa %s246, 1

</llo_original>
